<compile_context>
chip_gen: v6e
topology: v6e:2x2x1
jax: 0.10.0
libtpu: 0.0.40
codegen_flags: <defaults>
</compile_context>

<pallas_src>
import math

import jax
import jax.numpy as jnp
from jax.experimental import pallas as pl
from jax.experimental.pallas import tpu as pltpu


def _round_up(x, m):
    return ((x + m - 1) // m) * m


def _mixmil_bag_kernel(x_ref, w_ref, u_ref):
    # x_ref: (Nb*I, Q)      instance features (caller dtype; cast to MXU dtype here)
    # w_ref: (Q, 2*PS_pad)  fused weights: cols [0:PS]=beta_u, [PS_pad:PS_pad+PS]=eta,
    #                       each half zero-padded to a 128-lane boundary
    # u_ref: (Nb, PS_pad)   f32 bag embedding effect (lane-dense slab)
    nb, ps_pad = u_ref.shape
    rows, _ = x_ref.shape
    inst = rows // nb

    x = x_ref[...]
    if x.dtype != w_ref.dtype:
        # Cast in-kernel (VPU has plenty of slack; avoids a wrapper-side HBM pass).
        x = x.astype(w_ref.dtype)

    # One big MXU pass per grid step: all bags flattened into the M dimension.
    wt = jnp.dot(x, w_ref[...], preferred_element_type=jnp.float32)  # (Nb*I, 2*PS_pad) f32
    wt = wt.reshape(nb, inst, 2 * ps_pad)

    logits = wt[:, :, :ps_pad]   # X @ beta_u  (lane-tile-aligned static slice)
    t = wt[:, :, ps_pad:]        # X @ eta

    # Softmax over the instance axis (axis=1), per bag and per (p, s) column.
    # All f32 (v5e VPU/EUP have no bf16). Exact divide: kernel is HBM-bound,
    # so the VPU divide is free and matches torch.softmax exactly.
    m = jnp.max(logits, axis=1, keepdims=True)
    e = jnp.exp(logits - m)
    denom = jnp.sum(e, axis=1, keepdims=True)
    w = e / denom

    # u = sum_i w * t  -> one unmasked lane-dense (Nb, PS_pad) store per step.
    u_ref[...] = jnp.sum(w * t, axis=1)


def _choose_block_bags(N, I, Q, in_itemsize, ps_pad, *,
                       vmem_budget=24 << 20, min_grid_steps=8):
    """Pick Nb (bags per grid step) from a VMEM byte budget.

    Per-row working set: double-buffered input + bf16 cast copy + (2*PS_pad)-wide
    f32 matmul result + ~3 extra PS_pad-wide f32 softmax temporaries.
    Nb is a multiple of 8 (sublane rule on the output block); it is capped so the
    grid keeps >= min_grid_steps steps when N allows it (v7x 2-TC sharding).
    """
    per_row = 2 * Q * in_itemsize + 2 * Q + (2 + 3) * ps_pad * 4
    rows = max(I, vmem_budget // max(per_row, 1))
    nb = max(1, rows // I)
    nb = max(8, (nb // 8) * 8)
    nb_grid_cap = _round_up(max(1, -(-N // min_grid_steps)), 8)
    nb = min(nb, max(8, nb_grid_cap))
    nb = min(nb, _round_up(N, 8))      # never exceed the padded bag count
    return nb


def mixmil_bag_effect(Xs, beta_u, eta, *, compute_dtype=jnp.bfloat16, block_bags=None):
    """Pallas implementation of MixMIL._calc_bag_emb_effect_tensor."""
    N, I, Q = Xs.shape
    Qb, P, S = beta_u.shape
    assert Qb == Q
    PS = P * S
    PS_pad = _round_up(PS, 128)   # lane-align each half of the fused weights

    # Fused, lane-padded weights [beta_u | 0 | eta | 0] -> (Q, 2*PS_pad), bf16 for the MXU.
    # Padded columns are zero: their softmax is uniform and their values are zero,
    # so the padded output lanes are exactly 0 and get sliced off below.
    W = jnp.zeros((Q, 2 * PS_pad), dtype=compute_dtype)
    W = W.at[:, :PS].set(beta_u.reshape(Q, PS).astype(compute_dtype))
    W = W.at[:, PS_pad:PS_pad + PS].set(eta.astype(compute_dtype).reshape(Q, PS))

    in_itemsize = Xs.dtype.itemsize   # Xs streams in its HBM dtype; cast happens in-kernel
    Nb = _choose_block_bags(N, I, Q, in_itemsize, PS_pad) if block_bags is None else block_bags
    G = pl.cdiv(N, Nb)
    N_pad = G * Nb
    if N_pad != N:
        # Zero-padded bags produce u == 0 and are sliced off after the kernel.
        Xs = jnp.pad(Xs, ((0, N_pad - N), (0, 0), (0, 0)))

    # Flatten bags in the wrapper (free on contiguous HBM) so the kernel block is 2-D.
    Xf = Xs.reshape(N_pad * I, Q)

    cost = pl.CostEstimate(
        flops=2 * N_pad * I * Q * 2 * PS_pad + 4 * N_pad * I * PS_pad,
        transcendentals=N_pad * I * PS_pad,
        bytes_accessed=(N_pad * I * Q * in_itemsize
                        + N_pad * PS_pad * 4
                        + Q * 2 * PS_pad * W.dtype.itemsize),
    )

    # VMEM budget: double-buffered input + double-buffered output + weights
    # (grid-invariant; single-buffering it via pl.Buffered(1) would save one tiny
    # copy but is skipped for compile portability) + in-kernel temporaries + headroom.
    vmem_bytes = (2 * Nb * I * Q * in_itemsize
                  + 2 * Nb * PS_pad * 4
                  + 2 * Q * 2 * PS_pad * W.dtype.itemsize
                  + Nb * I * (2 * Q + 6 * PS_pad * 4)
                  + (4 << 20))
    vmem_limit = int(min(max(vmem_bytes, 32 << 20), 60 << 20))   # v7x-safe (<64 MiB)

    u = pl.pallas_call(
        _mixmil_bag_kernel,
        out_shape=jax.ShapeDtypeStruct((N_pad, PS_pad), jnp.float32),
        grid_spec=pltpu.PrefetchScalarGridSpec(
            num_scalar_prefetch=0,
            grid=(G,),
            in_specs=[
                pl.BlockSpec((Nb * I, Q), lambda n: (n, 0)),       # Nb bags per step
                pl.BlockSpec((Q, 2 * PS_pad), lambda n: (0, 0)),   # resident fused weights
            ],
            out_specs=pl.BlockSpec((Nb, PS_pad), lambda n: (n, 0)),  # unmasked lane-dense store
        ),
        compiler_params=pltpu.CompilerParams(
            dimension_semantics=("parallel",),
            vmem_limit_bytes=vmem_limit,
        ),
        cost_estimate=cost,
    )(Xf, W)

    return u[:N, :PS].reshape(N, P, S)


def mixmil_forward(Xs, beta_u, beta_z, scaling=None, compute_dtype=jnp.bfloat16):
    """MixMIL.forward (tensor Xs path) with posterior samples beta_u, beta_z: (Q, P, S)."""
    # b = sqrt(mean_q(beta_z**2)) ; eta = beta_z / b   (cheap, f32)
    b = jnp.sqrt(jnp.mean(beta_z.astype(jnp.float32) ** 2, axis=0, keepdims=True))  # (1, P, S)
    eta = beta_z.astype(jnp.float32) / b

    u = mixmil_bag_effect(Xs, beta_u, eta, compute_dtype=compute_dtype)              # (N, P, S)

    if scaling is None:
        mean = jnp.mean(u, axis=0)
        std = jnp.std(u, axis=0, ddof=1)   # torch .std() default: unbiased
    else:
        mean, std = scaling
    # torch: if std has any NaN, replace std by scalar 1
    std = jnp.where(jnp.any(jnp.isnan(std)), jnp.ones_like(std), std)
    return b * (u - mean) / std


def _reference_forward(Xs, beta_u, beta_z, scaling=None, compute_dtype=jnp.bfloat16):
    """Pure-JAX reference mirroring the PyTorch einsum path, precision-matched
    to the kernel (inputs rounded to bf16 exactly as the kernel sees them,
    accumulation in f32)."""
    b = jnp.sqrt(jnp.mean(beta_z ** 2, axis=0, keepdims=True))
    eta = beta_z / b
    X = Xs.astype(compute_dtype).astype(jnp.float32)
    bu = beta_u.astype(compute_dtype).astype(jnp.float32)
    et = eta.astype(compute_dtype).astype(jnp.float32)
    _w = jnp.einsum('niq,qps->nips', X, bu)
    w = jax.nn.softmax(_w, axis=1)
    t = jnp.einsum('niq,qps->nips', X, et)
    u = jnp.einsum('nips,nips->nps', w, t)
    if scaling is None:
        mean = jnp.mean(u, axis=0)
        std = jnp.std(u, axis=0, ddof=1)
    else:
        mean, std = scaling
    std = jnp.where(jnp.any(jnp.isnan(std)), jnp.ones_like(std), std)
    return b * (u - mean) / std


if __name__ == "__main__":
    # Model hyper-parameters (as in MixMIL.__init__): Q features, K fixed-effect
    # covariates, P outputs, binomial likelihood. Forward uses n_samples=8.
    Q, K, P = 32, 8, 1
    n_samples = 8
    N, I = 8, 16  # bags, instances per bag

    key = jax.random.PRNGKey(0)
    k_x, k_mu, k_eps = jax.random.split(key, 3)

    # Instance features per bag: Xs (N, I, Q)
    Xs = jax.random.normal(k_x, (N, I, Q), dtype=jnp.float32)

    # Deterministic synthetic parameters (shapes from __init__):
    #   alpha: (K, P) -- zeros; only used in loss(), not in forward()
    #   log_sigma_u / log_sigma_z: (1, P) = 0.5*log(0.5)
    alpha = jnp.zeros((K, P), dtype=jnp.float32)
    log_sigma_u = jnp.full((1, P), 0.5 * math.log(0.5), dtype=jnp.float32)
    log_sigma_z = jnp.full((1, P), 0.5 * math.log(0.5), dtype=jnp.float32)

    # Posterior GaussianVariationalPosterior(2Q, P): q_mu (2Q, P), diag scale.
    # Sample n_samples deterministically: beta = q_mu + sigma * eps, (2Q, P, S).
    q_mu = 0.1 * jax.random.normal(k_mu, (2 * Q, P), dtype=jnp.float32)
    q_log_sigma = jnp.full((2 * Q, P), -1.0, dtype=jnp.float32)
    eps = jax.random.normal(k_eps, (2 * Q, P, n_samples), dtype=jnp.float32)
    beta = q_mu[:, :, None] + jnp.exp(q_log_sigma)[:, :, None] * eps  # (2Q, P, S)
    beta_u = beta[:Q]   # (Q, P, S)
    beta_z = beta[Q:]   # (Q, P, S)

    # TODO(synk): loss()/likelihood()/KL terms (Binomial, LowRankMVN) and the
    # scatter (variable-bag-size) path are not implemented here; for ragged bags
    # use PrefetchScalarGridSpec with per-bag offsets + pl.ds on the instance axis.

    out = mixmil_forward(Xs, beta_u, beta_z)
    out = jax.block_until_ready(out)

    ref = _reference_forward(Xs, beta_u, beta_z)
    assert out.shape == (N, P, n_samples)
    # Tolerance accounts for MXU-vs-XLA accumulation-order differences on bf16
    # rounded inputs; structural bugs would be O(1).
    assert jnp.allclose(out, ref, atol=2e-2, rtol=2e-2), "mismatch vs reference"

    print("KERNEL_OK")
</pallas_src>

<mosaic_0001>
module attributes {stable_mosaic.version = 11 : i64} {
  func.func @_mixmil_bag_kernel(%arg0: i32, %arg1: memref<128x32xf32, #tpu.memory_space<vmem>>, %arg2: memref<32x256xbf16, #tpu.memory_space<vmem>>, %arg3: memref<8x128xf32, #tpu.memory_space<vmem>>) attributes {dimension_semantics = [#tpu.dimension_semantics<parallel>], iteration_bounds = array<i64: 1>, scalar_prefetch = 0 : i64, scratch_operands = 0 : i64, tpu.core_type = #tpu.core_type<tc>, window_params = [{transform_indices = @transform_0, window_bounds = array<i64: 128, 32>}, {pipeline_mode = #tpu.pipeline_mode<synchronous>, transform_indices = @transform_1, window_bounds = array<i64: 32, 256>}, {transform_indices = @transform_2, window_bounds = array<i64: 8, 128>}]} {
    %c0 = arith.constant 0 : index
    %c0_0 = arith.constant 0 : index
    %0 = vector.load %arg1[%c0, %c0_0] : memref<128x32xf32, #tpu.memory_space<vmem>>, vector<128x32xf32>
    %1 = arith.truncf %0 : vector<128x32xf32> to vector<128x32xbf16>
    %c0_1 = arith.constant 0 : index
    %c0_2 = arith.constant 0 : index
    %2 = vector.load %arg2[%c0_1, %c0_2] : memref<32x256xbf16, #tpu.memory_space<vmem>>, vector<32x256xbf16>
    %cst = arith.constant dense<0.000000e+00> : vector<128x256xf32>
    %3 = tpu.matmul %1, %2, %cst {dimension_numbers = #tpu.dot_dimension_numbers<[1], [0], [0], [1], [0, 0, 1, 1], [], []>} : vector<128x32xbf16>, vector<32x256xbf16>, vector<128x256xf32> -> vector<128x256xf32>
    %4 = vector.shape_cast %3 : vector<128x256xf32> to vector<8x16x256xf32>
    %5 = vector.extract_strided_slice %4 {offsets = [0, 0, 0], sizes = [8, 16, 128], strides = [1, 1, 1]} : vector<8x16x256xf32> to vector<8x16x128xf32>
    %6 = vector.extract_strided_slice %4 {offsets = [0, 0, 128], sizes = [8, 16, 128], strides = [1, 1, 1]} : vector<8x16x256xf32> to vector<8x16x128xf32>
    %cst_3 = arith.constant dense<0xFF800000> : vector<8x128xf32>
    %7 = vector.multi_reduction <maximumf>, %5, %cst_3 [1] : vector<8x16x128xf32> to vector<8x128xf32>
    %8 = vector.shape_cast %7 : vector<8x128xf32> to vector<8x1x128xf32>
    %9 = vector.broadcast %8 : vector<8x1x128xf32> to vector<8x16x128xf32>
    %10 = arith.subf %5, %9 : vector<8x16x128xf32>
    %11 = math.exp %10 : vector<8x16x128xf32>
    %cst_4 = arith.constant dense<0.000000e+00> : vector<8x128xf32>
    %12 = vector.multi_reduction <add>, %11, %cst_4 [1] : vector<8x16x128xf32> to vector<8x128xf32>
    %13 = vector.shape_cast %12 : vector<8x128xf32> to vector<8x1x128xf32>
    %14 = vector.broadcast %13 : vector<8x1x128xf32> to vector<8x16x128xf32>
    %15 = arith.divf %11, %14 : vector<8x16x128xf32>
    %16 = arith.mulf %15, %6 : vector<8x16x128xf32>
    %cst_5 = arith.constant dense<0.000000e+00> : vector<8x128xf32>
    %17 = vector.multi_reduction <add>, %16, %cst_5 [1] : vector<8x16x128xf32> to vector<8x128xf32>
    %c0_6 = arith.constant 0 : index
    %c0_7 = arith.constant 0 : index
    %18 = vector.load %arg3[%c0_6, %c0_7] : memref<8x128xf32, #tpu.memory_space<vmem>>, vector<8x128xf32>
    tpu.vector_store %arg3[%c0_6, %c0_7], %17 {strides = array<i32>} : memref<8x128xf32, #tpu.memory_space<vmem>>, vector<8x128xf32>,
    return
  }
  func.func @transform_0(%arg0: i32) -> (i32, i32) {
    %c0_i32 = arith.constant 0 : i32
    %c0_i32_0 = arith.constant 0 : i32
    return %arg0, %c0_i32 : i32, i32
  }
  func.func @transform_1(%arg0: i32) -> (i32, i32) {
    %c0_i32 = arith.constant 0 : i32
    %c0_i32_0 = arith.constant 0 : i32
    %c0_i32_1 = arith.constant 0 : i32
    return %c0_i32, %c0_i32_0 : i32, i32
  }
  func.func @transform_2(%arg0: i32) -> (i32, i32) {
    %c0_i32 = arith.constant 0 : i32
    %c0_i32_0 = arith.constant 0 : i32
    return %arg0, %c0_i32 : i32, i32
  }
}

</mosaic_0001>

<llo_original>
// kernel: tpu_custom_call.1
$region0: #{tpu_custom_call.1}
  #allocation0 [shape = 'u32[]', space=smem, size = 0x4, offset = 0x4, fixed_abs, tag = 'smem constant byte address 0x4 - core index']
  #allocation1 [shape = 'u32[144,128]{1,0:T(1,128)}', space=vmem, size = 0x12000, scoped, tag = 'internal scratch']
  %s0 = inlined_call_operand.vmem [shape: f32[128,32], index: 0, kind: input, shape index: {}]
  %s1 = inlined_call_operand.vmem [shape: bf16[32,256], index: 1, kind: input, shape index: {}]
  %s2 = inlined_call_operand.hbm [shape: f32[8,128], index: 2, kind: output, shape index: {}]
  %s3 = sld [smem:[#allocation0]]
  $region18: #{tpu_custom_call.1} parent=0
    _
  %s5 = ssub.s32 1, %s3
  %s6 = scalar_select 0, %s5, %s3
  $region1: #{tpu_custom_call.1} parent=0
    #allocation2 [shape = 'u8[4096]{0}', space=vmem, size = 0x1000, scoped, tag = 'output window, operand 0, single buffered']
    #allocation3 [shape = 's32[1]{0}', space=sflag, size = 0x4, scoped, tag = 'scoped memory for tpu_custom_call.1']
    %7 = vsyncpa [#allocation3], 0
    // Predicated region
    $region2: #{tpu_custom_call.1} parent=1 // pred_check
      _
    $region3: #{tpu_custom_call.1} parent=1 // pred_check_branch
      %9 = sbr.rel (0) target = $region5
    $region4: #{tpu_custom_call.1} parent=1 // pred_region
      _
    $region5: #{tpu_custom_call.1} parent=1 // pred_fallthru
      _
    // Predicated region
    $region6: #{tpu_custom_call.1} parent=1 // pred_check
      _
    $region7: #{tpu_custom_call.1} parent=1 // pred_check_branch
      %11 = sbr.rel (0) target = $region9
    $region8: #{tpu_custom_call.1} parent=1 // pred_region
      _
    $region9: #{tpu_custom_call.1} parent=1 // pred_fallthru
      _
    %v13 = vld [vmem:[%s0] sm:$0xff]
    %v14 = vld [vmem:[%s0 + $0x8] sm:$0xff]
    %v15 = vld [vmem:[%s0 + $0x10] sm:$0xff]
    %v16 = vld [vmem:[%s0 + $0x18] sm:$0xff]
    %v17 = vld [vmem:[%s0 + $0x20] sm:$0xff]
    %v18 = vld [vmem:[%s0 + $0x28] sm:$0xff]
    %v19 = vld [vmem:[%s0 + $0x30] sm:$0xff]
    %v20 = vld [vmem:[%s0 + $0x38] sm:$0xff]
    %v21 = vld [vmem:[%s0 + $0x40] sm:$0xff]
    %v22 = vld [vmem:[%s0 + $0x48] sm:$0xff]
    %v23 = vld [vmem:[%s0 + $0x50] sm:$0xff]
    %v24 = vld [vmem:[%s0 + $0x58] sm:$0xff]
    %v25 = vld [vmem:[%s0 + $0x60] sm:$0xff]
    %v26 = vld [vmem:[%s0 + $0x68] sm:$0xff]
    %v27 = vld [vmem:[%s0 + $0x70] sm:$0xff]
    %v28 = vld [vmem:[%s0 + $0x78] sm:$0xff]
    %v29 = vpack.c.bf16 %v14, %v13
    %v30 = vpack.c.bf16 %v16, %v15
    %v31 = vpack.c.bf16 %v18, %v17
    %v32 = vpack.c.bf16 %v20, %v19
    %v33 = vpack.c.bf16 %v22, %v21
    %v34 = vpack.c.bf16 %v24, %v23
    %v35 = vpack.c.bf16 %v26, %v25
    %v36 = vpack.c.bf16 %v28, %v27
    %v37 = vld [vmem:[%s1] sm:$0xff]
    %v38 = vld [vmem:[%s1 + $0x8] sm:$0xff]
    %v39 = vld [vmem:[%s1 + $0x10] sm:$0xff]
    %v40 = vld [vmem:[%s1 + $0x18] sm:$0xff]
    %v45 = vunpack.c.l.b16 %v37
    %v46 = vunpack.c.h.b16 %v37
    %v47 = vunpack.c.l.b16 %v38
    %v48 = vunpack.c.h.b16 %v38
    %v49 = vunpack.c.l.b16 %v39
    %v50 = vunpack.c.h.b16 %v39
    %v51 = vunpack.c.l.b16 %v40
    %v52 = vunpack.c.h.b16 %v40
    %v53 = vpack.c.b16 %v47, %v45
    %v54 = vpack.c.b16 %v48, %v46
    %v55 = vpack.c.b16 %v51, %v49
    %v56 = vpack.c.b16 %v52, %v50
    %vm61 = vcmask 261120
    %v63 = vsel %vm61, %v29, 0
    %v66 = vsel %vm61, %v30, 0
    %v69 = vsel %vm61, %v31, 0
    %v72 = vsel %vm61, %v32, 0
    %v75 = vsel %vm61, %v33, 0
    %v78 = vsel %vm61, %v34, 0
    %v81 = vsel %vm61, %v35, 0
    %v84 = vsel %vm61, %v36, 0
    %86 = vmatprep.subr.bf16.mxu0 0
    %87 = vmatpush1.bf16.msra.mxu0 0
    %88 = vmatprep.subr.bf16.mxu0 0
    %89 = vmatpush1.bf16.msra.mxu0 0
    %90 = vmatprep.subr.bf16.mxu0 0
    %91 = vmatpush1.bf16.msra.mxu0 0
    %92 = vmatprep.subr.bf16.mxu0 0
    %93 = vmatpush1.bf16.msra.mxu0 0
    %94 = vmatprep.subr.bf16.mxu0 0
    %95 = vmatpush1.bf16.msra.mxu0 0
    %96 = vmatprep.subr.bf16.mxu0 0
    %97 = vmatpush1.bf16.msra.mxu0 0
    %98 = vmatprep.subr.bf16.mxu0 %v56
    %99 = vmatpush1.bf16.msra.mxu0 %v55
    %100 = vmatprep.subr.bf16.mxu0 %v54
    %101 = vmatpush1.bf16.msra.mxu0 %v53
    %102 = vmatprep.subr.bf16.mxu0 0
    %103 = vmatpush2.bf16.msra.mxu0 0
    %104 = vmatprep.subr.bf16.mxu0 0
    %105 = vmatpush2.bf16.msra.mxu0 0
    %106 = vmatprep.subr.bf16.mxu0 0
    %107 = vmatpush2.bf16.msra.mxu0 0
    %108 = vmatprep.subr.bf16.mxu0 0
    %109 = vmatpush2.bf16.msra.mxu0 0
    %110 = vmatprep.subr.bf16.mxu0 0
    %111 = vmatpush2.bf16.msra.mxu0 0
    %112 = vmatprep.subr.bf16.mxu0 0
    %113 = vmatpush2.bf16.msra.mxu0 0
    %114 = vmatprep.subr.bf16.mxu0 0
    %115 = vmatpush2.bf16.msra.mxu0 0
    %116 = vmatprep.subr.bf16.mxu0 0
    %117 = vmatpush2.bf16.msra.mxu0 0
    %118 = vmatprep.mubr.bf16.mxu0 0
    %119 = vmatmul.mubr.bf16.gmra.mxu0 %v63
    %v120 = vpop.f32.mrf.mxu0
    %v121 = vadd.f32 0.0, %v120
    %v122 = vpop.f32.mrf.mxu0
    %v123 = vadd.f32 0.0, %v122
    %v124 = vpop.f32.mrf.mxu0
    %v125 = vadd.f32 0.0, %v124
    %v126 = vpop.f32.mrf.mxu0
    %v127 = vadd.f32 0.0, %v126
    %128 = vmatprep.mubr.bf16.mxu0 0
    %129 = vmatmul.mubr.bf16.gmra.mxu0 %v66
    %v130 = vpop.f32.mrf.mxu0
    %v131 = vadd.f32 0.0, %v130
    %v132 = vpop.f32.mrf.mxu0
    %v133 = vadd.f32 0.0, %v132
    %v134 = vpop.f32.mrf.mxu0
    %v135 = vadd.f32 0.0, %v134
    %v136 = vpop.f32.mrf.mxu0
    %v137 = vadd.f32 0.0, %v136
    %138 = vmatprep.mubr.bf16.mxu0 0
    %139 = vmatmul.mubr.bf16.gmra.mxu0 %v69
    %v140 = vpop.f32.mrf.mxu0
    %v141 = vadd.f32 0.0, %v140
    %v142 = vpop.f32.mrf.mxu0
    %v143 = vadd.f32 0.0, %v142
    %v144 = vpop.f32.mrf.mxu0
    %v145 = vadd.f32 0.0, %v144
    %v146 = vpop.f32.mrf.mxu0
    %v147 = vadd.f32 0.0, %v146
    %148 = vmatprep.mubr.bf16.mxu0 0
    %149 = vmatmul.mubr.bf16.gmra.mxu0 %v72
    %v150 = vpop.f32.mrf.mxu0
    %v151 = vadd.f32 0.0, %v150
    %v152 = vpop.f32.mrf.mxu0
    %v153 = vadd.f32 0.0, %v152
    %v154 = vpop.f32.mrf.mxu0
    %v155 = vadd.f32 0.0, %v154
    %v156 = vpop.f32.mrf.mxu0
    %v157 = vadd.f32 0.0, %v156
    %158 = vmatprep.mubr.bf16.mxu0 0
    %159 = vmatmul.mubr.bf16.gmra.mxu0 %v75
    %v160 = vpop.f32.mrf.mxu0
    %v161 = vadd.f32 0.0, %v160
    %v162 = vpop.f32.mrf.mxu0
    %v163 = vadd.f32 0.0, %v162
    %v164 = vpop.f32.mrf.mxu0
    %v165 = vadd.f32 0.0, %v164
    %v166 = vpop.f32.mrf.mxu0
    %v167 = vadd.f32 0.0, %v166
    %168 = vmatprep.mubr.bf16.mxu0 0
    %169 = vmatmul.mubr.bf16.gmra.mxu0 %v78
    %v170 = vpop.f32.mrf.mxu0
    %v171 = vadd.f32 0.0, %v170
    %v172 = vpop.f32.mrf.mxu0
    %v173 = vadd.f32 0.0, %v172
    %v174 = vpop.f32.mrf.mxu0
    %v175 = vadd.f32 0.0, %v174
    %v176 = vpop.f32.mrf.mxu0
    %v177 = vadd.f32 0.0, %v176
    %178 = vmatprep.mubr.bf16.mxu0 0
    %179 = vmatmul.mubr.bf16.gmra.mxu0 %v81
    %v180 = vpop.f32.mrf.mxu0
    %v181 = vadd.f32 0.0, %v180
    %v182 = vpop.f32.mrf.mxu0
    %v183 = vadd.f32 0.0, %v182
    %v184 = vpop.f32.mrf.mxu0
    %v185 = vadd.f32 0.0, %v184
    %v186 = vpop.f32.mrf.mxu0
    %v187 = vadd.f32 0.0, %v186
    %188 = vmatprep.mubr.bf16.mxu0 0
    %189 = vmatmul.mubr.bf16.gmra.mxu0 %v84
    %v190 = vpop.f32.mrf.mxu0
    %v191 = vadd.f32 0.0, %v190
    %v192 = vpop.f32.mrf.mxu0
    %v193 = vadd.f32 0.0, %v192
    %v194 = vpop.f32.mrf.mxu0
    %v195 = vadd.f32 0.0, %v194
    %v196 = vpop.f32.mrf.mxu0
    %v197 = vadd.f32 0.0, %v196
    %198 = vdwg.mxu0
    %v199 = vmax.f32 %v121, %v125
    %v200 = vrot.slane %v199, 4
    %v201 = vmax.f32 %v199, %v200
    %v202 = vrot.slane %v201, 2
    %v203 = vmax.f32 %v201, %v202
    %v204 = vrot.slane %v203, 1
    %v205 = vmax.f32 %v203, %v204
    %v206 = vmax.f32 %v131, %v135
    %v207 = vrot.slane %v206, 4
    %v208 = vmax.f32 %v206, %v207
    %v209 = vrot.slane %v208, 2
    %v210 = vmax.f32 %v208, %v209
    %v211 = vrot.slane %v210, 1
    %v212 = vmax.f32 %v210, %v211
    %v213 = vmax.f32 %v141, %v145
    %v214 = vrot.slane %v213, 4
    %v215 = vmax.f32 %v213, %v214
    %v216 = vrot.slane %v215, 2
    %v217 = vmax.f32 %v215, %v216
    %v218 = vrot.slane %v217, 1
    %v219 = vmax.f32 %v217, %v218
    %v220 = vmax.f32 %v151, %v155
    %v221 = vrot.slane %v220, 4
    %v222 = vmax.f32 %v220, %v221
    %v223 = vrot.slane %v222, 2
    %v224 = vmax.f32 %v222, %v223
    %v225 = vrot.slane %v224, 1
    %v226 = vmax.f32 %v224, %v225
    %v227 = vmax.f32 %v161, %v165
    %v228 = vrot.slane %v227, 4
    %v229 = vmax.f32 %v227, %v228
    %v230 = vrot.slane %v229, 2
    %v231 = vmax.f32 %v229, %v230
    %v232 = vrot.slane %v231, 1
    %v233 = vmax.f32 %v231, %v232
    %v234 = vmax.f32 %v171, %v175
    %v235 = vrot.slane %v234, 4
    %v236 = vmax.f32 %v234, %v235
    %v237 = vrot.slane %v236, 2
    %v238 = vmax.f32 %v236, %v237
    %v239 = vrot.slane %v238, 1
    %v240 = vmax.f32 %v238, %v239
    %v241 = vmax.f32 %v181, %v185
    %v242 = vrot.slane %v241, 4
    %v243 = vmax.f32 %v241, %v242
    %v244 = vrot.slane %v243, 2
    %v245 = vmax.f32 %v243, %v244
    %v246 = vrot.slane %v245, 1
    %v247 = vmax.f32 %v245, %v246
    %v248 = vmax.f32 %v191, %v195
    %v249 = vrot.slane %v248, 4
    %v250 = vmax.f32 %v248, %v249
    %v251 = vrot.slane %v250, 2
    %v252 = vmax.f32 %v250, %v251
    %v253 = vrot.slane %v252, 1
    %v254 = vmax.f32 %v252, %v253
    %v255 = vsub.f32 %v121, %v205
    %v256 = vsub.f32 %v125, %v205
    %v257 = vsub.f32 %v131, %v212
    %v258 = vsub.f32 %v135, %v212
    %v259 = vsub.f32 %v141, %v219
    %v260 = vsub.f32 %v145, %v219
    %v261 = vsub.f32 %v151, %v226
    %v262 = vsub.f32 %v155, %v226
    %v263 = vsub.f32 %v161, %v233
    %v264 = vsub.f32 %v165, %v233
    %v265 = vsub.f32 %v171, %v240
    %v266 = vsub.f32 %v175, %v240
    %v267 = vsub.f32 %v181, %v247
    %v268 = vsub.f32 %v185, %v247
    %v269 = vsub.f32 %v191, %v254
    %v270 = vsub.f32 %v195, %v254
    %v271 = vmul.f32 %v255, 1.442695
    %v272 = vpow.pop %v271
    %v273 = vmul.f32 %v256, 1.442695
    %v274 = vpow.pop %v273
    %v275 = vmul.f32 %v257, 1.442695
    %v276 = vpow.pop %v275
    %v277 = vmul.f32 %v258, 1.442695
    %v278 = vpow.pop %v277
    %v279 = vmul.f32 %v259, 1.442695
    %v280 = vpow.pop %v279
    %v281 = vmul.f32 %v260, 1.442695
    %v282 = vpow.pop %v281
    %v283 = vmul.f32 %v261, 1.442695
    %v284 = vpow.pop %v283
    %v285 = vmul.f32 %v262, 1.442695
    %v286 = vpow.pop %v285
    %v287 = vmul.f32 %v263, 1.442695
    %v288 = vpow.pop %v287
    %v289 = vmul.f32 %v264, 1.442695
    %v290 = vpow.pop %v289
    %v291 = vmul.f32 %v265, 1.442695
    %v292 = vpow.pop %v291
    %v293 = vmul.f32 %v266, 1.442695
    %v294 = vpow.pop %v293
    %v295 = vmul.f32 %v267, 1.442695
    %v296 = vpow.pop %v295
    %v297 = vmul.f32 %v268, 1.442695
    %v298 = vpow.pop %v297
    %v299 = vmul.f32 %v269, 1.442695
    %v300 = vpow.pop %v299
    %v301 = vmul.f32 %v270, 1.442695
    %v302 = vpow.pop %v301
    %v303 = vadd.f32 %v272, %v274
    %v304 = vrot.slane %v303, 4
    %v305 = vadd.f32 %v303, %v304
    %v306 = vrot.slane %v305, 2
    %v307 = vadd.f32 %v305, %v306
    %v308 = vrot.slane %v307, 1
    %v309 = vadd.f32 %v307, %v308
    %v310 = vadd.f32 %v276, %v278
    %v311 = vrot.slane %v310, 4
    %v312 = vadd.f32 %v310, %v311
    %v313 = vrot.slane %v312, 2
    %v314 = vadd.f32 %v312, %v313
    %v315 = vrot.slane %v314, 1
    %v316 = vadd.f32 %v314, %v315
    %v317 = vadd.f32 %v280, %v282
    %v318 = vrot.slane %v317, 4
    %v319 = vadd.f32 %v317, %v318
    %v320 = vrot.slane %v319, 2
    %v321 = vadd.f32 %v319, %v320
    %v322 = vrot.slane %v321, 1
    %v323 = vadd.f32 %v321, %v322
    %v324 = vadd.f32 %v284, %v286
    %v325 = vrot.slane %v324, 4
    %v326 = vadd.f32 %v324, %v325
    %v327 = vrot.slane %v326, 2
    %v328 = vadd.f32 %v326, %v327
    %v329 = vrot.slane %v328, 1
    %v330 = vadd.f32 %v328, %v329
    %v331 = vadd.f32 %v288, %v290
    %v332 = vrot.slane %v331, 4
    %v333 = vadd.f32 %v331, %v332
    %v334 = vrot.slane %v333, 2
    %v335 = vadd.f32 %v333, %v334
    %v336 = vrot.slane %v335, 1
    %v337 = vadd.f32 %v335, %v336
    %v338 = vadd.f32 %v292, %v294
    %v339 = vrot.slane %v338, 4
    %v340 = vadd.f32 %v338, %v339
    %v341 = vrot.slane %v340, 2
    %v342 = vadd.f32 %v340, %v341
    %v343 = vrot.slane %v342, 1
    %v344 = vadd.f32 %v342, %v343
    %v345 = vadd.f32 %v296, %v298
    %v346 = vrot.slane %v345, 4
    %v347 = vadd.f32 %v345, %v346
    %v348 = vrot.slane %v347, 2
    %v349 = vadd.f32 %v347, %v348
    %v350 = vrot.slane %v349, 1
    %v351 = vadd.f32 %v349, %v350
    %v352 = vadd.f32 %v300, %v302
    %v353 = vrot.slane %v352, 4
    %v354 = vadd.f32 %v352, %v353
    %v355 = vrot.slane %v354, 2
    %v356 = vadd.f32 %v354, %v355
    %v357 = vrot.slane %v356, 1
    %v358 = vadd.f32 %v356, %v357
    %v359 = vrcp.pop %v309
    %v360 = vmul.f32 %v272, %v359
    %v361 = vmul.f32 %v274, %v359
    %v362 = vrcp.pop %v316
    %v363 = vmul.f32 %v276, %v362
    %v364 = vmul.f32 %v278, %v362
    %v365 = vrcp.pop %v323
    %v366 = vmul.f32 %v280, %v365
    %v367 = vmul.f32 %v282, %v365
    %v368 = vrcp.pop %v330
    %v369 = vmul.f32 %v284, %v368
    %v370 = vmul.f32 %v286, %v368
    %v371 = vrcp.pop %v337
    %v372 = vmul.f32 %v288, %v371
    %v373 = vmul.f32 %v290, %v371
    %v374 = vrcp.pop %v344
    %v375 = vmul.f32 %v292, %v374
    %v376 = vmul.f32 %v294, %v374
    %v377 = vrcp.pop %v351
    %v378 = vmul.f32 %v296, %v377
    %v379 = vmul.f32 %v298, %v377
    %v380 = vrcp.pop %v358
    %v381 = vmul.f32 %v300, %v380
    %v382 = vmul.f32 %v302, %v380
    %v383 = vmul.f32 %v360, %v123
    %v384 = vmul.f32 %v361, %v127
    %v385 = vmul.f32 %v363, %v133
    %v386 = vmul.f32 %v364, %v137
    %v387 = vmul.f32 %v366, %v143
    %v388 = vmul.f32 %v367, %v147
    %v389 = vmul.f32 %v369, %v153
    %v390 = vmul.f32 %v370, %v157
    %v391 = vmul.f32 %v372, %v163
    %v392 = vmul.f32 %v373, %v167
    %v393 = vmul.f32 %v375, %v173
    %v394 = vmul.f32 %v376, %v177
    %v395 = vmul.f32 %v378, %v183
    %v396 = vmul.f32 %v379, %v187
    %v397 = vmul.f32 %v381, %v193
    %v398 = vmul.f32 %v382, %v197
    %v399 = vadd.f32 %v383, %v384
    %v400 = vrot.slane %v399, 4
    %v401 = vadd.f32 %v399, %v400
    %v402 = vrot.slane %v401, 2
    %v403 = vadd.f32 %v401, %v402
    %v404 = vrot.slane %v403, 1
    %v405 = vadd.f32 %v403, %v404
    %v406 = vadd.f32 %v385, %v386
    %v407 = vrot.slane %v406, 4
    %v408 = vadd.f32 %v406, %v407
    %v409 = vrot.slane %v408, 2
    %v410 = vadd.f32 %v408, %v409
    %v411 = vrot.slane %v410, 1
    %v412 = vadd.f32 %v410, %v411
    %v413 = vadd.f32 %v387, %v388
    %v414 = vrot.slane %v413, 4
    %v415 = vadd.f32 %v413, %v414
    %v416 = vrot.slane %v415, 2
    %v417 = vadd.f32 %v415, %v416
    %v418 = vrot.slane %v417, 1
    %v419 = vadd.f32 %v417, %v418
    %v420 = vadd.f32 %v389, %v390
    %v421 = vrot.slane %v420, 4
    %v422 = vadd.f32 %v420, %v421
    %v423 = vrot.slane %v422, 2
    %v424 = vadd.f32 %v422, %v423
    %v425 = vrot.slane %v424, 1
    %v426 = vadd.f32 %v424, %v425
    %v427 = vadd.f32 %v391, %v392
    %v428 = vrot.slane %v427, 4
    %v429 = vadd.f32 %v427, %v428
    %v430 = vrot.slane %v429, 2
    %v431 = vadd.f32 %v429, %v430
    %v432 = vrot.slane %v431, 1
    %v433 = vadd.f32 %v431, %v432
    %v434 = vadd.f32 %v393, %v394
    %v435 = vrot.slane %v434, 4
    %v436 = vadd.f32 %v434, %v435
    %v437 = vrot.slane %v436, 2
    %v438 = vadd.f32 %v436, %v437
    %v439 = vrot.slane %v438, 1
    %v440 = vadd.f32 %v438, %v439
    %v441 = vadd.f32 %v395, %v396
    %v442 = vrot.slane %v441, 4
    %v443 = vadd.f32 %v441, %v442
    %v444 = vrot.slane %v443, 2
    %v445 = vadd.f32 %v443, %v444
    %v446 = vrot.slane %v445, 1
    %v447 = vadd.f32 %v445, %v446
    %v448 = vadd.f32 %v397, %v398
    %v449 = vrot.slane %v448, 4
    %v450 = vadd.f32 %v448, %v449
    %v451 = vrot.slane %v450, 2
    %v452 = vadd.f32 %v450, %v451
    %v453 = vrot.slane %v452, 1
    %v454 = vadd.f32 %v452, %v453
    %vm463 = vcmask 1041409
    %v464 = vsel %vm463, %v412, %v405
    %vm465 = vcmask 1042434
    %v466 = vsel %vm465, %v419, %v464
    %vm467 = vcmask 1043459
    %v468 = vsel %vm467, %v426, %v466
    %vm469 = vcmask 1044484
    %v470 = vsel %vm469, %v433, %v468
    %vm471 = vcmask 1045509
    %v472 = vsel %vm471, %v440, %v470
    %vm473 = vcmask 1046534
    %v474 = vsel %vm473, %v447, %v472
    %vm475 = vcmask 1047559
    %v476 = vsel %vm475, %v454, %v474
    %478 = vst [vmem:[#allocation2] sm:$0xff] %v476
    // Predicated region
    $region10: #{tpu_custom_call.1} parent=1 // pred_check
      _
    $region11: #{tpu_custom_call.1} parent=1 // pred_check_branch
      %480 = sbr.rel (0) target = $region13
    $region12: #{tpu_custom_call.1} parent=1 // pred_region
      %s482 = ssub.s32 128, 128
      %483 = vsyncadd [#allocation3], %s482
      %s485 = sshll.u32 [#allocation2], 4
      %s486 = int_to_ptr.vmem [resolvable:$true] %s485
      %488 = dma.vmem_to_hbm [thread:$0]  %s486, 128, %s2, [#allocation3]
    $region13: #{tpu_custom_call.1} parent=1 // pred_fallthru
      _
    // Predicated region
    $region14: #{tpu_custom_call.1} parent=1 // pred_check
      _
    $region15: #{tpu_custom_call.1} parent=1 // pred_check_branch
      %490 = sbr.rel (0) target = $region17
    $region16: #{tpu_custom_call.1} parent=1 // pred_region
      %491 = dma.done [#allocation3], 128
    $region17: #{tpu_custom_call.1} parent=1 // pred_fallthru
      _
    %492 = vsyncpa [#allocation3], 1

</llo_original>
